<compile_context>
chip_gen: v7x
topology: tpu7x:2x2x1
jax: 0.10.0
libtpu: 0.0.40
codegen_flags: <defaults>
</compile_context>

<pallas_src>
import functools

import jax
import jax.numpy as jnp
from jax.experimental import pallas as pl
from jax.experimental.pallas import tpu as pltpu

LAYER_NORM_EPS = 1e-6


def visual_embedding_kernel(feats_ref, pos8_ref, order_ref,
                            wf_ref, wp_ref, prm_ref, out_ref, *, d_model):
    """One row-block (TR rows of the flattened [B*N] token axis) per grid step.

    feats_ref : [TR, F]   bf16  visual features
    pos8_ref  : [TR, 8]   f32   (x1, x2, y1, y2, area, 0, 0, 0)
    order_ref : [TR, DP]  bf16  pre-gathered img-order + obj-order embeddings
    wf_ref    : [F, DP]   bf16  feat Linear weight (transposed, zero-padded cols)
    wp_ref    : [8, DP]   f32   pos Linear weight (rows 5..7 zero, zero-padded cols)
    prm_ref   : [8, DP]   f32   row0=b_feat row1=b_pos row2=ln_feat_w row3=ln_pos_w
    out_ref   : [TR, DP]
    """
    inv_d = jnp.float32(1.0 / d_model)

    b_feat = prm_ref[0:1, :]
    b_pos = prm_ref[1:2, :]
    ln_f = prm_ref[2:3, :]
    ln_p = prm_ref[3:4, :]

    # ---- feat branch: bf16 MXU matmul, f32 accumulate, T5 RMS-norm in f32 ----
    feat_lin = jnp.dot(feats_ref[...], wf_ref[...],
                       preferred_element_type=jnp.float32) + b_feat
    # Padded d_model columns are exactly zero, so sum()/d_model == mean over true D.
    var_f = jnp.sum(feat_lin * feat_lin, axis=-1, keepdims=True) * inv_d
    feat_emb = feat_lin * jax.lax.rsqrt(var_f + LAYER_NORM_EPS) * ln_f

    # ---- pos branch: single K=8 matmul (pos & area pre-concatenated/padded) ----
    pos_lin = jnp.dot(pos8_ref[...], wp_ref[...],
                      preferred_element_type=jnp.float32) + b_pos
    var_p = jnp.sum(pos_lin * pos_lin, axis=-1, keepdims=True) * inv_d
    pos_emb = pos_lin * jax.lax.rsqrt(var_p + LAYER_NORM_EPS) * ln_p

    # ---- residual sum with (pre-gathered) order embeddings; lane-dense store ----
    out_ref[...] = (feat_emb + pos_emb
                    + order_ref[...].astype(jnp.float32)).astype(out_ref.dtype)


def visual_embedding(feats, pos, order_sum, w_feat, b_feat, w_pos, b_pos,
                     ln_feat_w, ln_pos_w, *, row_tile=256, out_dtype=None):
    """feats: [B, N, F] ; pos: [B, N, 4] ; order_sum: [N, D] ; returns [B, N, D]."""
    B, N, F = feats.shape
    D = w_feat.shape[1]
    out_dtype = feats.dtype if out_dtype is None else out_dtype

    f32 = jnp.float32
    # Lane-dense output: pad d_model up to a multiple of 128.
    DP = ((D + 127) // 128) * 128
    # Flatten (B, N) -> rows; choose a row tile sized for the MXU (256 default),
    # clamped to an 8-aligned size for small demo inputs.
    R = B * N
    TR = row_tile if R >= row_tile else max(8, ((R + 7) // 8) * 8)
    RP = ((R + TR - 1) // TR) * TR
    grid = (RP // TR,)

    # pos5 = [x1, x2, y1, y2, area], padded to 8 K-columns (no in-kernel slicing).
    area = (pos[..., 3] - pos[..., 2]) * (pos[..., 1] - pos[..., 0])
    pos5 = jnp.concatenate([pos, area[..., None]], axis=-1).astype(f32)
    pos8 = jnp.pad(pos5.reshape(R, 5), ((0, RP - R), (0, 3)))

    feats_flat = jnp.pad(feats.astype(jnp.bfloat16).reshape(R, F),
                         ((0, RP - R), (0, 0)))
    order_flat = jnp.pad(
        jnp.broadcast_to(order_sum[None].astype(jnp.bfloat16), (B, N, D)).reshape(R, D),
        ((0, RP - R), (0, DP - D)))

    # Weights: zero-pad the d_model columns (keeps the RMS-norm sums exact) and
    # the pos-weight rows (so pos8's padded columns contribute nothing).
    wf = jnp.pad(w_feat.astype(jnp.bfloat16), ((0, 0), (0, DP - D)))
    wp = jnp.pad(w_pos.astype(f32), ((0, 3), (0, DP - D)))
    prm = jnp.zeros((8, DP), f32)
    prm = prm.at[0, :D].set(b_feat.astype(f32))
    prm = prm.at[1, :D].set(b_pos.astype(f32))
    prm = prm.at[2, :D].set(ln_feat_w.astype(f32))
    prm = prm.at[3, :D].set(ln_pos_w.astype(f32))

    kernel = functools.partial(visual_embedding_kernel, d_model=D)

    # NOTE: at real VL-T5 sizes (TR=256, F=2048, D=768, bf16 weights single-
    # buffered) the VMEM working set is ~8-11 MB, under the scoped default on
    # v5e/v6e/v7x, so no vmem_limit_bytes override is needed.
    def build(single_buffer_weights):
        if single_buffer_weights:
            def const_spec(shape):
                return pl.BlockSpec(shape, lambda r: (0, 0),
                                    pipeline_mode=pl.Buffered(1))
        else:
            def const_spec(shape):
                return pl.BlockSpec(shape, lambda r: (0, 0))
        return pl.pallas_call(
            kernel,
            out_shape=jax.ShapeDtypeStruct((RP, DP), out_dtype),
            grid=grid,
            in_specs=[
                pl.BlockSpec((TR, F), lambda r: (r, 0)),    # feats rows
                pl.BlockSpec((TR, 8), lambda r: (r, 0)),    # pos(+area) rows
                pl.BlockSpec((TR, DP), lambda r: (r, 0)),   # order-embedding rows
                const_spec((F, DP)),                        # W_feat (grid-invariant)
                const_spec((8, DP)),                        # W_pos  (grid-invariant)
                const_spec((8, DP)),                        # packed biases + LN weights
            ],
            out_specs=pl.BlockSpec((TR, DP), lambda r: (r, 0)),
            compiler_params=pltpu.CompilerParams(
                dimension_semantics=("parallel",)),
        )

    args = (feats_flat, pos8, order_flat, wf, wp, prm)
    try:
        # Single-buffer the grid-invariant operands (halves their VMEM footprint).
        out_p = build(True)(*args)
    except Exception:
        # Fallback for JAX versions where pipeline_mode isn't supported on the
        # top-level pallas_call pipeline (only costs extra VMEM, not correctness).
        out_p = build(False)(*args)

    return out_p[:R, :D].reshape(B, N, D)


def reference(feats, pos, order_sum, w_feat, b_feat, w_pos, b_pos,
              ln_feat_w, ln_pos_w):
    """Pure-JAX (f32) mirror of the PyTorch forward with default order ids."""
    area = (pos[..., 3] - pos[..., 2]) * (pos[..., 1] - pos[..., 0])
    pos5 = jnp.concatenate([pos, area[..., None]], axis=-1)

    def t5_ln(h, w):
        var = jnp.mean(jnp.square(h.astype(jnp.float32)), axis=-1, keepdims=True)
        return w * (h * jax.lax.rsqrt(var + LAYER_NORM_EPS))

    feat_emb = t5_ln(feats @ w_feat + b_feat, ln_feat_w)
    pos_emb = t5_ln(pos5 @ w_pos + b_pos, ln_pos_w)
    return feat_emb + pos_emb + order_sum[None, :, :]


if __name__ == "__main__":
    # Small shapes consistent with the module.
    B, N, FEAT_DIM, POS_DIM, D_MODEL = 2, 8, 16, 4, 32
    OBJ_VOCAB, IMG_VOCAB = 20, 4

    key = jax.random.PRNGKey(0)
    ks = jax.random.split(key, 9)

    feats = jax.random.normal(ks[0], (B, N, FEAT_DIM), dtype=jnp.float32)
    # boxes in [0, 1]: (x1, x2, y1, y2)
    pos = jax.random.uniform(ks[1], (B, N, 4), dtype=jnp.float32)

    # Parameters (deterministic synthetic init; nn.Linear weights stored transposed).
    w_feat = jax.random.normal(ks[2], (FEAT_DIM, D_MODEL), dtype=jnp.float32) * 0.05
    b_feat = jax.random.normal(ks[3], (D_MODEL,), dtype=jnp.float32) * 0.01
    w_pos = jax.random.normal(ks[4], (POS_DIM + 1, D_MODEL), dtype=jnp.float32) * 0.05
    b_pos = jax.random.normal(ks[5], (D_MODEL,), dtype=jnp.float32) * 0.01
    ln_feat_w = jnp.ones((D_MODEL,), dtype=jnp.float32)
    ln_pos_w = jnp.ones((D_MODEL,), dtype=jnp.float32)

    obj_table = jax.random.normal(ks[6], (OBJ_VOCAB, D_MODEL), dtype=jnp.float32) * 0.02
    img_table = jax.random.normal(ks[7], (IMG_VOCAB, D_MODEL), dtype=jnp.float32) * 0.02

    # Default order ids (module behavior when img/obj_order_ids are None):
    img_order_ids = jnp.zeros((N,), dtype=jnp.int32)
    obj_order_ids = OBJ_VOCAB - jnp.arange(N, dtype=jnp.int32) - 1
    # Gather glue (embedding lookup), pre-summed; broadcast over batch in wrapper.
    order_sum = img_table[img_order_ids] + obj_table[obj_order_ids]   # [N, D]

    out = visual_embedding(feats, pos, order_sum, w_feat, b_feat,
                           w_pos, b_pos, ln_feat_w, ln_pos_w)
    out = jax.block_until_ready(out)

    ref = reference(feats, pos, order_sum, w_feat, b_feat, w_pos, b_pos,
                    ln_feat_w, ln_pos_w)
    assert out.shape == (B, N, D_MODEL)
    # bf16 feats/weights on the MXU path -> loosened tolerance vs the f32 reference.
    assert jnp.allclose(out, ref, atol=3e-2, rtol=3e-2), "mismatch vs reference"

    print("KERNEL_OK")
</pallas_src>

<mosaic_0001>
module attributes {stable_mosaic.version = 11 : i64} {
  func.func @visual_embedding_kernel(%arg0: i32, %arg1: memref<16x16xbf16, #tpu.memory_space<vmem>>, %arg2: memref<16x8xf32, #tpu.memory_space<vmem>>, %arg3: memref<16x128xbf16, #tpu.memory_space<vmem>>, %arg4: memref<16x128xbf16, #tpu.memory_space<vmem>>, %arg5: memref<8x128xf32, #tpu.memory_space<vmem>>, %arg6: memref<8x128xf32, #tpu.memory_space<vmem>>, %arg7: memref<16x128xf32, #tpu.memory_space<vmem>>) attributes {dimension_semantics = [#tpu.dimension_semantics<parallel>], iteration_bounds = array<i64: 1>, scalar_prefetch = 0 : i64, scratch_operands = 0 : i64, tpu.core_type = #tpu.core_type<tc>, window_params = [{transform_indices = @transform_0, window_bounds = array<i64: 16, 16>}, {transform_indices = @transform_1, window_bounds = array<i64: 16, 8>}, {transform_indices = @transform_2, window_bounds = array<i64: 16, 128>}, {pipeline_mode = #tpu.pipeline_mode<synchronous>, transform_indices = @transform_3, window_bounds = array<i64: 16, 128>}, {pipeline_mode = #tpu.pipeline_mode<synchronous>, transform_indices = @transform_4, window_bounds = array<i64: 8, 128>}, {pipeline_mode = #tpu.pipeline_mode<synchronous>, transform_indices = @transform_5, window_bounds = array<i64: 8, 128>}, {transform_indices = @transform_6, window_bounds = array<i64: 16, 128>}]} {
    %c0 = arith.constant 0 : index
    %c0_0 = arith.constant 0 : index
    %0 = vector.load %arg6[%c0, %c0_0] : memref<8x128xf32, #tpu.memory_space<vmem>>, vector<1x128xf32>
    %c1 = arith.constant 1 : index
    %c0_1 = arith.constant 0 : index
    %1 = vector.load %arg6[%c1, %c0_1] : memref<8x128xf32, #tpu.memory_space<vmem>>, vector<1x128xf32>
    %c2 = arith.constant 2 : index
    %c0_2 = arith.constant 0 : index
    %2 = vector.load %arg6[%c2, %c0_2] : memref<8x128xf32, #tpu.memory_space<vmem>>, vector<1x128xf32>
    %c3 = arith.constant 3 : index
    %c0_3 = arith.constant 0 : index
    %3 = vector.load %arg6[%c3, %c0_3] : memref<8x128xf32, #tpu.memory_space<vmem>>, vector<1x128xf32>
    %c0_4 = arith.constant 0 : index
    %c0_5 = arith.constant 0 : index
    %4 = vector.load %arg1[%c0_4, %c0_5] : memref<16x16xbf16, #tpu.memory_space<vmem>>, vector<16x16xbf16>
    %c0_6 = arith.constant 0 : index
    %c0_7 = arith.constant 0 : index
    %5 = vector.load %arg4[%c0_6, %c0_7] : memref<16x128xbf16, #tpu.memory_space<vmem>>, vector<16x128xbf16>
    %cst = arith.constant dense<0.000000e+00> : vector<16x128xf32>
    %6 = tpu.matmul %4, %5, %cst {dimension_numbers = #tpu.dot_dimension_numbers<[1], [0], [0], [1], [0, 0, 1, 1], [], []>} : vector<16x16xbf16>, vector<16x128xbf16>, vector<16x128xf32> -> vector<16x128xf32>
    %7 = vector.broadcast %0 : vector<1x128xf32> to vector<16x128xf32>
    %8 = arith.addf %6, %7 : vector<16x128xf32>
    %9 = arith.mulf %8, %8 : vector<16x128xf32>
    %cst_8 = arith.constant dense<0.000000e+00> : vector<16xf32>
    %10 = vector.multi_reduction <add>, %9, %cst_8 [1] : vector<16x128xf32> to vector<16xf32>
    %11 = vector.shape_cast %10 : vector<16xf32> to vector<16x1xf32>
    %cst_9 = arith.constant 3.125000e-02 : f32
    %12 = vector.broadcast %cst_9 : f32 to vector<16x1xf32>
    %13 = arith.mulf %11, %12 : vector<16x1xf32>
    %cst_10 = arith.constant 9.99999997E-7 : f32
    %14 = vector.broadcast %cst_10 : f32 to vector<16x1xf32>
    %15 = arith.addf %13, %14 : vector<16x1xf32>
    %16 = math.rsqrt %15 : vector<16x1xf32>
    %17 = vector.broadcast %16 : vector<16x1xf32> to vector<16x128xf32>
    %18 = arith.mulf %8, %17 : vector<16x128xf32>
    %19 = vector.broadcast %2 : vector<1x128xf32> to vector<16x128xf32>
    %20 = arith.mulf %18, %19 : vector<16x128xf32>
    %c0_11 = arith.constant 0 : index
    %c0_12 = arith.constant 0 : index
    %21 = vector.load %arg2[%c0_11, %c0_12] : memref<16x8xf32, #tpu.memory_space<vmem>>, vector<16x8xf32>
    %c0_13 = arith.constant 0 : index
    %c0_14 = arith.constant 0 : index
    %22 = vector.load %arg5[%c0_13, %c0_14] : memref<8x128xf32, #tpu.memory_space<vmem>>, vector<8x128xf32>
    %cst_15 = arith.constant dense<0.000000e+00> : vector<16x128xf32>
    %23 = tpu.matmul %21, %22, %cst_15 {dimension_numbers = #tpu.dot_dimension_numbers<[1], [0], [0], [1], [0, 0, 1, 1], [], []>} : vector<16x8xf32>, vector<8x128xf32>, vector<16x128xf32> -> vector<16x128xf32>
    %24 = vector.broadcast %1 : vector<1x128xf32> to vector<16x128xf32>
    %25 = arith.addf %23, %24 : vector<16x128xf32>
    %26 = arith.mulf %25, %25 : vector<16x128xf32>
    %cst_16 = arith.constant dense<0.000000e+00> : vector<16xf32>
    %27 = vector.multi_reduction <add>, %26, %cst_16 [1] : vector<16x128xf32> to vector<16xf32>
    %28 = vector.shape_cast %27 : vector<16xf32> to vector<16x1xf32>
    %cst_17 = arith.constant 3.125000e-02 : f32
    %29 = vector.broadcast %cst_17 : f32 to vector<16x1xf32>
    %30 = arith.mulf %28, %29 : vector<16x1xf32>
    %cst_18 = arith.constant 9.99999997E-7 : f32
    %31 = vector.broadcast %cst_18 : f32 to vector<16x1xf32>
    %32 = arith.addf %30, %31 : vector<16x1xf32>
    %33 = math.rsqrt %32 : vector<16x1xf32>
    %34 = vector.broadcast %33 : vector<16x1xf32> to vector<16x128xf32>
    %35 = arith.mulf %25, %34 : vector<16x128xf32>
    %36 = vector.broadcast %3 : vector<1x128xf32> to vector<16x128xf32>
    %37 = arith.mulf %35, %36 : vector<16x128xf32>
    %38 = arith.addf %20, %37 : vector<16x128xf32>
    %c0_19 = arith.constant 0 : index
    %c0_20 = arith.constant 0 : index
    %39 = vector.load %arg3[%c0_19, %c0_20] : memref<16x128xbf16, #tpu.memory_space<vmem>>, vector<16x128xbf16>
    %40 = arith.extf %39 : vector<16x128xbf16> to vector<16x128xf32>
    %41 = arith.addf %38, %40 : vector<16x128xf32>
    %c0_21 = arith.constant 0 : index
    %c0_22 = arith.constant 0 : index
    %42 = vector.load %arg7[%c0_21, %c0_22] : memref<16x128xf32, #tpu.memory_space<vmem>>, vector<16x128xf32>
    tpu.vector_store %arg7[%c0_21, %c0_22], %41 {strides = array<i32>} : memref<16x128xf32, #tpu.memory_space<vmem>>, vector<16x128xf32>,
    return
  }
  func.func @transform_0(%arg0: i32) -> (i32, i32) {
    %c0_i32 = arith.constant 0 : i32
    %c0_i32_0 = arith.constant 0 : i32
    return %arg0, %c0_i32 : i32, i32
  }
  func.func @transform_1(%arg0: i32) -> (i32, i32) {
    %c0_i32 = arith.constant 0 : i32
    %c0_i32_0 = arith.constant 0 : i32
    return %arg0, %c0_i32 : i32, i32
  }
  func.func @transform_2(%arg0: i32) -> (i32, i32) {
    %c0_i32 = arith.constant 0 : i32
    %c0_i32_0 = arith.constant 0 : i32
    return %arg0, %c0_i32 : i32, i32
  }
  func.func @transform_3(%arg0: i32) -> (i32, i32) {
    %c0_i32 = arith.constant 0 : i32
    %c0_i32_0 = arith.constant 0 : i32
    %c0_i32_1 = arith.constant 0 : i32
    return %c0_i32, %c0_i32_0 : i32, i32
  }
  func.func @transform_4(%arg0: i32) -> (i32, i32) {
    %c0_i32 = arith.constant 0 : i32
    %c0_i32_0 = arith.constant 0 : i32
    %c0_i32_1 = arith.constant 0 : i32
    return %c0_i32, %c0_i32_0 : i32, i32
  }
  func.func @transform_5(%arg0: i32) -> (i32, i32) {
    %c0_i32 = arith.constant 0 : i32
    %c0_i32_0 = arith.constant 0 : i32
    %c0_i32_1 = arith.constant 0 : i32
    return %c0_i32, %c0_i32_0 : i32, i32
  }
  func.func @transform_6(%arg0: i32) -> (i32, i32) {
    %c0_i32 = arith.constant 0 : i32
    %c0_i32_0 = arith.constant 0 : i32
    return %arg0, %c0_i32 : i32, i32
  }
}

module attributes {stable_mosaic.version = 11 : i64} {
  func.func @visual_embedding_kernel(%arg0: i32, %arg1: memref<16x16xbf16, #tpu.memory_space<vmem>>, %arg2: memref<16x8xf32, #tpu.memory_space<vmem>>, %arg3: memref<16x128xbf16, #tpu.memory_space<vmem>>, %arg4: memref<16x128xbf16, #tpu.memory_space<vmem>>, %arg5: memref<8x128xf32, #tpu.memory_space<vmem>>, %arg6: memref<8x128xf32, #tpu.memory_space<vmem>>, %arg7: memref<16x128xf32, #tpu.memory_space<vmem>>) attributes {dimension_semantics = [#tpu.dimension_semantics<parallel>], iteration_bounds = array<i64: 1>, scalar_prefetch = 0 : i64, scratch_operands = 0 : i64, tpu.core_type = #tpu.core_type<tc>, window_params = [{transform_indices = @transform_0, window_bounds = array<i64: 16, 16>}, {transform_indices = @transform_1, window_bounds = array<i64: 16, 8>}, {transform_indices = @transform_2, window_bounds = array<i64: 16, 128>}, {pipeline_mode = #tpu.pipeline_mode<synchronous>, transform_indices = @transform_3, window_bounds = array<i64: 16, 128>}, {pipeline_mode = #tpu.pipeline_mode<synchronous>, transform_indices = @transform_4, window_bounds = array<i64: 8, 128>}, {pipeline_mode = #tpu.pipeline_mode<synchronous>, transform_indices = @transform_5, window_bounds = array<i64: 8, 128>}, {transform_indices = @transform_6, window_bounds = array<i64: 16, 128>}]} {
    %c0 = arith.constant 0 : index
    %c0_0 = arith.constant 0 : index
    %0 = vector.load %arg6[%c0, %c0_0] : memref<8x128xf32, #tpu.memory_space<vmem>>, vector<1x128xf32>
    %c1 = arith.constant 1 : index
    %c0_1 = arith.constant 0 : index
    %1 = vector.load %arg6[%c1, %c0_1] : memref<8x128xf32, #tpu.memory_space<vmem>>, vector<1x128xf32>
    %c2 = arith.constant 2 : index
    %c0_2 = arith.constant 0 : index
    %2 = vector.load %arg6[%c2, %c0_2] : memref<8x128xf32, #tpu.memory_space<vmem>>, vector<1x128xf32>
    %c3 = arith.constant 3 : index
    %c0_3 = arith.constant 0 : index
    %3 = vector.load %arg6[%c3, %c0_3] : memref<8x128xf32, #tpu.memory_space<vmem>>, vector<1x128xf32>
    %c0_4 = arith.constant 0 : index
    %c0_5 = arith.constant 0 : index
    %4 = vector.load %arg1[%c0_4, %c0_5] : memref<16x16xbf16, #tpu.memory_space<vmem>>, vector<16x16xbf16>
    %c0_6 = arith.constant 0 : index
    %c0_7 = arith.constant 0 : index
    %5 = vector.load %arg4[%c0_6, %c0_7] : memref<16x128xbf16, #tpu.memory_space<vmem>>, vector<16x128xbf16>
    %cst = arith.constant dense<0.000000e+00> : vector<16x128xf32>
    %6 = tpu.matmul %4, %5, %cst {dimension_numbers = #tpu.dot_dimension_numbers<[1], [0], [0], [1], [0, 0, 1, 1], [], []>} : vector<16x16xbf16>, vector<16x128xbf16>, vector<16x128xf32> -> vector<16x128xf32>
    %7 = vector.broadcast %0 : vector<1x128xf32> to vector<16x128xf32>
    %8 = arith.addf %6, %7 : vector<16x128xf32>
    %9 = arith.mulf %8, %8 : vector<16x128xf32>
    %cst_8 = arith.constant dense<0.000000e+00> : vector<16xf32>
    %10 = vector.multi_reduction <add>, %9, %cst_8 [1] : vector<16x128xf32> to vector<16xf32>
    %11 = vector.shape_cast %10 : vector<16xf32> to vector<16x1xf32>
    %cst_9 = arith.constant 3.125000e-02 : f32
    %12 = vector.broadcast %cst_9 : f32 to vector<16x1xf32>
    %13 = arith.mulf %11, %12 : vector<16x1xf32>
    %cst_10 = arith.constant 9.99999997E-7 : f32
    %14 = vector.broadcast %cst_10 : f32 to vector<16x1xf32>
    %15 = arith.addf %13, %14 : vector<16x1xf32>
    %16 = math.rsqrt %15 : vector<16x1xf32>
    %17 = vector.broadcast %16 : vector<16x1xf32> to vector<16x128xf32>
    %18 = arith.mulf %8, %17 : vector<16x128xf32>
    %19 = vector.broadcast %2 : vector<1x128xf32> to vector<16x128xf32>
    %20 = arith.mulf %18, %19 : vector<16x128xf32>
    %c0_11 = arith.constant 0 : index
    %c0_12 = arith.constant 0 : index
    %21 = vector.load %arg2[%c0_11, %c0_12] : memref<16x8xf32, #tpu.memory_space<vmem>>, vector<16x8xf32>
    %c0_13 = arith.constant 0 : index
    %c0_14 = arith.constant 0 : index
    %22 = vector.load %arg5[%c0_13, %c0_14] : memref<8x128xf32, #tpu.memory_space<vmem>>, vector<8x128xf32>
    %cst_15 = arith.constant dense<0.000000e+00> : vector<16x128xf32>
    %23 = tpu.matmul %21, %22, %cst_15 {dimension_numbers = #tpu.dot_dimension_numbers<[1], [0], [0], [1], [0, 0, 1, 1], [], []>} : vector<16x8xf32>, vector<8x128xf32>, vector<16x128xf32> -> vector<16x128xf32>
    %24 = vector.broadcast %1 : vector<1x128xf32> to vector<16x128xf32>
    %25 = arith.addf %23, %24 : vector<16x128xf32>
    %26 = arith.mulf %25, %25 : vector<16x128xf32>
    %cst_16 = arith.constant dense<0.000000e+00> : vector<16xf32>
    %27 = vector.multi_reduction <add>, %26, %cst_16 [1] : vector<16x128xf32> to vector<16xf32>
    %28 = vector.shape_cast %27 : vector<16xf32> to vector<16x1xf32>
    %cst_17 = arith.constant 3.125000e-02 : f32
    %29 = vector.broadcast %cst_17 : f32 to vector<16x1xf32>
    %30 = arith.mulf %28, %29 : vector<16x1xf32>
    %cst_18 = arith.constant 9.99999997E-7 : f32
    %31 = vector.broadcast %cst_18 : f32 to vector<16x1xf32>
    %32 = arith.addf %30, %31 : vector<16x1xf32>
    %33 = math.rsqrt %32 : vector<16x1xf32>
    %34 = vector.broadcast %33 : vector<16x1xf32> to vector<16x128xf32>
    %35 = arith.mulf %25, %34 : vector<16x128xf32>
    %36 = vector.broadcast %3 : vector<1x128xf32> to vector<16x128xf32>
    %37 = arith.mulf %35, %36 : vector<16x128xf32>
    %38 = arith.addf %20, %37 : vector<16x128xf32>
    %c0_19 = arith.constant 0 : index
    %c0_20 = arith.constant 0 : index
    %39 = vector.load %arg3[%c0_19, %c0_20] : memref<16x128xbf16, #tpu.memory_space<vmem>>, vector<16x128xbf16>
    %40 = arith.extf %39 : vector<16x128xbf16> to vector<16x128xf32>
    %41 = arith.addf %38, %40 : vector<16x128xf32>
    %c0_21 = arith.constant 0 : index
    %c0_22 = arith.constant 0 : index
    %42 = vector.load %arg7[%c0_21, %c0_22] : memref<16x128xf32, #tpu.memory_space<vmem>>, vector<16x128xf32>
    tpu.vector_store %arg7[%c0_21, %c0_22], %41 {strides = array<i32>} : memref<16x128xf32, #tpu.memory_space<vmem>>, vector<16x128xf32>,
    return
  }
  func.func @transform_0(%arg0: i32) -> (i32, i32) {
    %c0_i32 = arith.constant 0 : i32
    %c0_i32_0 = arith.constant 0 : i32
    return %arg0, %c0_i32 : i32, i32
  }
  func.func @transform_1(%arg0: i32) -> (i32, i32) {
    %c0_i32 = arith.constant 0 : i32
    %c0_i32_0 = arith.constant 0 : i32
    return %arg0, %c0_i32 : i32, i32
  }
  func.func @transform_2(%arg0: i32) -> (i32, i32) {
    %c0_i32 = arith.constant 0 : i32
    %c0_i32_0 = arith.constant 0 : i32
    return %arg0, %c0_i32 : i32, i32
  }
  func.func @transform_3(%arg0: i32) -> (i32, i32) {
    %c0_i32 = arith.constant 0 : i32
    %c0_i32_0 = arith.constant 0 : i32
    %c0_i32_1 = arith.constant 0 : i32
    return %c0_i32, %c0_i32_0 : i32, i32
  }
  func.func @transform_4(%arg0: i32) -> (i32, i32) {
    %c0_i32 = arith.constant 0 : i32
    %c0_i32_0 = arith.constant 0 : i32
    %c0_i32_1 = arith.constant 0 : i32
    return %c0_i32, %c0_i32_0 : i32, i32
  }
  func.func @transform_5(%arg0: i32) -> (i32, i32) {
    %c0_i32 = arith.constant 0 : i32
    %c0_i32_0 = arith.constant 0 : i32
    %c0_i32_1 = arith.constant 0 : i32
    return %c0_i32, %c0_i32_0 : i32, i32
  }
  func.func @transform_6(%arg0: i32) -> (i32, i32) {
    %c0_i32 = arith.constant 0 : i32
    %c0_i32_0 = arith.constant 0 : i32
    return %arg0, %c0_i32 : i32, i32
  }
}

</mosaic_0001>

<llo_original>
// kernel: tpu_custom_call.1
$region0: #{tpu_custom_call.1}
  #allocation0 [shape = 'u32[]', space=smem, size = 0x4, offset = 0x4, fixed_abs, tag = 'smem constant byte address 0x4 - core index']
  #allocation1 [shape = 'u32[144,128]{1,0:T(1,128)}', space=vmem, size = 0x12000, scoped, tag = 'internal scratch']
  %s0 = inlined_call_operand.vmem [shape: bf16[16,16], index: 0, kind: input, shape index: {}]
  %s1 = inlined_call_operand.vmem [shape: f32[16,8], index: 1, kind: input, shape index: {}]
  %s2 = inlined_call_operand.vmem [shape: bf16[16,128], index: 2, kind: input, shape index: {}]
  %s3 = inlined_call_operand.vmem [shape: bf16[16,128], index: 3, kind: input, shape index: {}]
  %s4 = inlined_call_operand.vmem [shape: f32[8,128], index: 4, kind: input, shape index: {}]
  %s5 = inlined_call_operand.vmem [shape: f32[8,128], index: 5, kind: input, shape index: {}]
  %s6 = inlined_call_operand.hbm [shape: f32[16,128], index: 6, kind: output, shape index: {}]
  %s7 = sld [smem:[#allocation0]]
  $region34: #{tpu_custom_call.1} parent=0
    _
  %s9 = ssub.s32 1, %s7
  %s10 = scalar_select 0, %s9, %s7
  $region1: #{tpu_custom_call.1} parent=0
    #allocation2 [shape = 'u8[8192]{0}', space=vmem, size = 0x2000, scoped, tag = 'output window, operand 0, single buffered']
    #allocation3 [shape = 's32[1]{0}', space=sflag, size = 0x4, scoped, tag = 'scoped memory for tpu_custom_call.1']
    %11 = vsyncpa [#allocation3], 0
    // Predicated region
    $region2: #{tpu_custom_call.1} parent=1 // pred_check
      _
    $region3: #{tpu_custom_call.1} parent=1 // pred_check_branch
      %13 = sbr.rel (0) target = $region5
    $region4: #{tpu_custom_call.1} parent=1 // pred_region
      _
    $region5: #{tpu_custom_call.1} parent=1 // pred_fallthru
      _
    // Predicated region
    $region6: #{tpu_custom_call.1} parent=1 // pred_check
      _
    $region7: #{tpu_custom_call.1} parent=1 // pred_check_branch
      %15 = sbr.rel (0) target = $region9
    $region8: #{tpu_custom_call.1} parent=1 // pred_region
      _
    $region9: #{tpu_custom_call.1} parent=1 // pred_fallthru
      _
    // Predicated region
    $region10: #{tpu_custom_call.1} parent=1 // pred_check
      _
    $region11: #{tpu_custom_call.1} parent=1 // pred_check_branch
      %17 = sbr.rel (0) target = $region13
    $region12: #{tpu_custom_call.1} parent=1 // pred_region
      _
    $region13: #{tpu_custom_call.1} parent=1 // pred_fallthru
      _
    // Predicated region
    $region14: #{tpu_custom_call.1} parent=1 // pred_check
      _
    $region15: #{tpu_custom_call.1} parent=1 // pred_check_branch
      %19 = sbr.rel (0) target = $region17
    $region16: #{tpu_custom_call.1} parent=1 // pred_region
      _
    $region17: #{tpu_custom_call.1} parent=1 // pred_fallthru
      _
    // Predicated region
    $region18: #{tpu_custom_call.1} parent=1 // pred_check
      _
    $region19: #{tpu_custom_call.1} parent=1 // pred_check_branch
      %21 = sbr.rel (0) target = $region21
    $region20: #{tpu_custom_call.1} parent=1 // pred_region
      _
    $region21: #{tpu_custom_call.1} parent=1 // pred_fallthru
      _
    // Predicated region
    $region22: #{tpu_custom_call.1} parent=1 // pred_check
      _
    $region23: #{tpu_custom_call.1} parent=1 // pred_check_branch
      %23 = sbr.rel (0) target = $region25
    $region24: #{tpu_custom_call.1} parent=1 // pred_region
      _
    $region25: #{tpu_custom_call.1} parent=1 // pred_fallthru
      _
    %v25 = vld [vmem:[%s5] sm:$0x1]
    %v26 = vld [vmem:[%s5 + $0x1] sm:$0x1]
    %v27 = vld [vmem:[%s5 + $0x2] sm:$0x1]
    %v28 = vld [vmem:[%s5 + $0x3] sm:$0x1]
    %v29 = vld [vmem:[%s0] sm:$0xf]
    %v30 = vld [vmem:[%s0 + $0x4] sm:$0xf]
    %v31 = vld [vmem:[%s3] sm:$0xf]
    %v32 = vld [vmem:[%s3 + $0x4] sm:$0xf]
    %v33 = vlaneseq
    %v34 = vshrl.u32 %v33, 7
    %v35 = vsub.s32 0, %v34
    %v36 = vrot.slane %v25, %v35
    %v39 = vunpack.c.l.b16 %v29
    %v40 = vunpack.c.l.b16 %v30
    %v41 = vpack.c.b16 %v40, %v39
    %v44 = vunpack.c.l.b16 %v31
    %v45 = vunpack.c.l.b16 %v32
    %v46 = vpack.c.b16 %v45, %v44
    %vm48 = vcmask 130048
    %v50 = vsel %vm48, %v41, 0
    %52 = vmatprep.subr.bf16.mxu0 0
    %53 = vmatpush1.bf16.msra.mxu0 %v46
    %54 = vmatprep.subr.bf16.mxu0 0
    %55 = vmatpush1.bf16.msra.mxu0 0
    %56 = vmatprep.subr.bf16.mxu0 0
    %57 = vmatpush1.bf16.msra.mxu0 0
    %58 = vmatprep.subr.bf16.mxu0 0
    %59 = vmatpush1.bf16.msra.mxu0 0
    %60 = vmatprep.subr.bf16.mxu0 0
    %61 = vmatpush1.bf16.msra.mxu0 0
    %62 = vmatprep.subr.bf16.mxu0 0
    %63 = vmatpush1.bf16.msra.mxu0 0
    %64 = vmatprep.subr.bf16.mxu0 0
    %65 = vmatpush1.bf16.msra.mxu0 0
    %66 = vmatprep.subr.bf16.mxu0 0
    %67 = vmatpush1.bf16.msra.mxu0 0
    %68 = vmatprep.subr.bf16.mxu0 0
    %69 = vmatpush1.bf16.msra.mxu0 0
    %70 = vmatprep.subr.bf16.mxu0 0
    %71 = vmatpush1.bf16.msra.mxu0 0
    %72 = vmatprep.subr.bf16.mxu0 0
    %73 = vmatpush1.bf16.msra.mxu0 0
    %74 = vmatprep.subr.bf16.mxu0 0
    %75 = vmatpush1.bf16.msra.mxu0 0
    %76 = vmatprep.subr.bf16.mxu0 0
    %77 = vmatpush1.bf16.msra.mxu0 0
    %78 = vmatprep.subr.bf16.mxu0 0
    %79 = vmatpush1.bf16.msra.mxu0 0
    %80 = vmatprep.subr.bf16.mxu0 0
    %81 = vmatpush1.bf16.msra.mxu0 0
    %82 = vmatprep.subr.bf16.mxu0 0
    %83 = vmatpush1.bf16.msra.mxu0 0
    %84 = vmatprep.mubr.bf16.mxu0 0
    %85 = vmatmul.mubr.bf16.gmra.mrb[0].mxu0 %v50
    %v86 = vpop.f32.mrb[0].mxu0
    %v87 = vadd.f32 %v36, %v86
    %v88 = vpop.f32.mrb[0].mxu0
    %v89 = vpop.f32.mrb[0].mxu0
    %v90 = vadd.f32 %v36, %v89
    %v91 = vpop.f32.mrb[0].mxu0
    %92 = vdwg.mxu0
    %v93 = vmul.f32 %v87, %v87
    %v94 = vmul.f32 %v90, %v90
    %95 = vadd.xlane.f32.xlu0 %v93
    %v96 = vpop.xlane.xlu0 %95
    %97 = vadd.xlane.f32.xlu0 %v94
    %v98 = vpop.xlane.xlu0 %97
    %v99 = vmul.f32 %v96, 0.03125
    %v100 = vmul.f32 %v98, 0.03125
    %v101 = vadd.f32 %v99, 1e-06
    %v102 = vadd.f32 %v100, 1e-06
    %v103 = vrsqrt.pop %v101
    %v104 = vrsqrt.pop %v102
    %v105 = vmul.f32 %v87, %v103
    %v106 = vmul.f32 %v90, %v104
    %v107 = vlaneseq
    %v108 = vshrl.u32 %v107, 7
    %v109 = vsub.s32 0, %v108
    %v110 = vrot.slane %v27, %v109
    %v111 = vmul.f32 %v105, %v110
    %v112 = vmul.f32 %v106, %v110
    %v113 = vld [vmem:[%s1] sm:$0xff]
    %v114 = vld [vmem:[%s1 + $0x8] sm:$0xff]
    %v115 = vld [vmem:[%s4] sm:$0xff]
    %v116 = vlaneseq
    %v117 = vshrl.u32 %v116, 7
    %v118 = vsub.s32 0, %v117
    %v119 = vrot.slane %v26, %v118
    %vm120 = vcmask 64512
    %v122 = vsel %vm120, %v113, 0
    %v125 = vsel %vm120, %v114, 0
    %127 = vmatprep.subr.mxu0 0.0
    %128 = vmatpush1.msra.mxu0 %v115
    %129 = vmatprep.subr.mxu0 0.0
    %130 = vmatpush1.msra.mxu0 0.0
    %131 = vmatprep.subr.mxu0 0.0
    %132 = vmatpush1.msra.mxu0 0.0
    %133 = vmatprep.subr.mxu0 0.0
    %134 = vmatpush1.msra.mxu0 0.0
    %135 = vmatprep.subr.mxu0 0.0
    %136 = vmatpush1.msra.mxu0 0.0
    %137 = vmatprep.subr.mxu0 0.0
    %138 = vmatpush1.msra.mxu0 0.0
    %139 = vmatprep.subr.mxu0 0.0
    %140 = vmatpush1.msra.mxu0 0.0
    %141 = vmatprep.subr.mxu0 0.0
    %142 = vmatpush1.msra.mxu0 0.0
    %143 = vmatprep.subr.mxu0 0.0
    %144 = vmatpush1.msra.mxu0 0.0
    %145 = vmatprep.subr.mxu0 0.0
    %146 = vmatpush1.msra.mxu0 0.0
    %147 = vmatprep.subr.mxu0 0.0
    %148 = vmatpush1.msra.mxu0 0.0
    %149 = vmatprep.subr.mxu0 0.0
    %150 = vmatpush1.msra.mxu0 0.0
    %151 = vmatprep.subr.mxu0 0.0
    %152 = vmatpush1.msra.mxu0 0.0
    %153 = vmatprep.subr.mxu0 0.0
    %154 = vmatpush1.msra.mxu0 0.0
    %155 = vmatprep.subr.mxu0 0.0
    %156 = vmatpush1.msra.mxu0 0.0
    %157 = vmatprep.subr.mxu0 0.0
    %158 = vmatpush1.msra.mxu0 0.0
    %159 = vmatprep.subr.mxu0 0.0
    %160 = vmatpush1.msra.mxu0 0.0
    %161 = vmatprep.subr.mxu0 0.0
    %162 = vmatpush1.msra.mxu0 0.0
    %163 = vmatprep.subr.mxu0 0.0
    %164 = vmatpush1.msra.mxu0 0.0
    %165 = vmatprep.subr.mxu0 0.0
    %166 = vmatpush1.msra.mxu0 0.0
    %167 = vmatprep.subr.mxu0 0.0
    %168 = vmatpush1.msra.mxu0 0.0
    %169 = vmatprep.subr.mxu0 0.0
    %170 = vmatpush1.msra.mxu0 0.0
    %171 = vmatprep.subr.mxu0 0.0
    %172 = vmatpush1.msra.mxu0 0.0
    %173 = vmatprep.subr.mxu0 0.0
    %174 = vmatpush1.msra.mxu0 0.0
    %175 = vmatprep.subr.mxu0 0.0
    %176 = vmatpush1.msra.mxu0 0.0
    %177 = vmatprep.subr.mxu0 0.0
    %178 = vmatpush1.msra.mxu0 0.0
    %179 = vmatprep.subr.mxu0 0.0
    %180 = vmatpush1.msra.mxu0 0.0
    %181 = vmatprep.subr.mxu0 0.0
    %182 = vmatpush1.msra.mxu0 0.0
    %183 = vmatprep.subr.mxu0 0.0
    %184 = vmatpush1.msra.mxu0 0.0
    %185 = vmatprep.subr.mxu0 0.0
    %186 = vmatpush1.msra.mxu0 0.0
    %187 = vmatprep.subr.mxu0 0.0
    %188 = vmatpush1.msra.mxu0 0.0
    %189 = vmatprep.subr.mxu0 0.0
    %190 = vmatpush1.msra.mxu0 0.0
    %191 = vmatprep.mubr.f32.mxu0 0.0
    %192 = vmatmul.mubr.f32.gmra.mrb[0].mxu0 %v122
    %v193 = vpop.f32.mrb[0].mxu0
    %v194 = vadd.f32 %v119, %v193
    %v195 = vpop.f32.mrb[0].mxu0
    %196 = vmatprep.mubr.f32.mxu0 0.0
    %197 = vmatmul.mubr.f32.gmra.mrb[0].mxu0 %v125
    %v198 = vpop.f32.mrb[0].mxu0
    %v199 = vadd.f32 %v119, %v198
    %v200 = vpop.f32.mrb[0].mxu0
    %201 = vdwg.mxu0
    %v202 = vmul.f32 %v194, %v194
    %v203 = vmul.f32 %v199, %v199
    %204 = vadd.xlane.f32.xlu0 %v202
    %v205 = vpop.xlane.xlu0 %204
    %206 = vadd.xlane.f32.xlu0 %v203
    %v207 = vpop.xlane.xlu0 %206
    %v208 = vmul.f32 %v205, 0.03125
    %v209 = vmul.f32 %v207, 0.03125
    %v210 = vadd.f32 %v208, 1e-06
    %v211 = vadd.f32 %v209, 1e-06
    %v212 = vrsqrt.pop %v210
    %v213 = vrsqrt.pop %v211
    %v214 = vmul.f32 %v194, %v212
    %v215 = vmul.f32 %v199, %v213
    %v216 = vlaneseq
    %v217 = vshrl.u32 %v216, 7
    %v218 = vsub.s32 0, %v217
    %v219 = vrot.slane %v28, %v218
    %v220 = vmul.f32 %v214, %v219
    %v221 = vmul.f32 %v215, %v219
    %v222 = vadd.f32 %v111, %v220
    %v223 = vadd.f32 %v112, %v221
    %v224 = vld [vmem:[%s2] sm:$0xf]
    %v225 = vld [vmem:[%s2 + $0x4] sm:$0xf]
    %v226 = vunpack.c.l.bf16 %v224
    %v227 = vunpack.c.l.bf16 %v225
    %v228 = vadd.f32 %v222, %v226
    %v229 = vadd.f32 %v223, %v227
    %230 = vst [vmem:[#allocation2] sm:$0xff] %v228
    %231 = vst [vmem:[#allocation2 + $0x8] sm:$0xff] %v229
    // Predicated region
    $region26: #{tpu_custom_call.1} parent=1 // pred_check
      _
    $region27: #{tpu_custom_call.1} parent=1 // pred_check_branch
      %233 = sbr.rel (0) target = $region29
    $region28: #{tpu_custom_call.1} parent=1 // pred_region
      %s235 = ssub.s32 256, 256
      %236 = vsyncadd [#allocation3], %s235
      %s237 = sshll.u32 [#allocation2], 4
      %s238 = int_to_ptr.vmem [resolvable:$true] %s237
      %243 = dma.vmem_to_hbm [thread:$0]  %s238, 256, %s6, [#allocation3], 128, 128, 8
    $region29: #{tpu_custom_call.1} parent=1 // pred_fallthru
      _
    // Predicated region
    $region30: #{tpu_custom_call.1} parent=1 // pred_check
      _
    $region31: #{tpu_custom_call.1} parent=1 // pred_check_branch
      %245 = sbr.rel (0) target = $region33
    $region32: #{tpu_custom_call.1} parent=1 // pred_region
      %246 = dma.done [#allocation3], 256
    $region33: #{tpu_custom_call.1} parent=1 // pred_fallthru
      _
    %247 = vsyncpa [#allocation3], 1

// kernel: tpu_custom_call.1
$region0: #{tpu_custom_call.1}
  #allocation0 [shape = 'u32[]', space=smem, size = 0x4, offset = 0x4, fixed_abs, tag = 'smem constant byte address 0x4 - core index']
  #allocation1 [shape = 'u32[144,128]{1,0:T(1,128)}', space=vmem, size = 0x12000, scoped, tag = 'internal scratch']
  %s0 = inlined_call_operand.vmem [shape: bf16[16,16], index: 0, kind: input, shape index: {}]
  %s1 = inlined_call_operand.vmem [shape: f32[16,8], index: 1, kind: input, shape index: {}]
  %s2 = inlined_call_operand.vmem [shape: bf16[16,128], index: 2, kind: input, shape index: {}]
  %s3 = inlined_call_operand.vmem [shape: bf16[16,128], index: 3, kind: input, shape index: {}]
  %s4 = inlined_call_operand.vmem [shape: f32[8,128], index: 4, kind: input, shape index: {}]
  %s5 = inlined_call_operand.vmem [shape: f32[8,128], index: 5, kind: input, shape index: {}]
  %s6 = inlined_call_operand.hbm [shape: f32[16,128], index: 6, kind: output, shape index: {}]
  %s7 = sld [smem:[#allocation0]]
  $region34: #{tpu_custom_call.1} parent=0
    _
  %s9 = ssub.s32 1, %s7
  %s10 = scalar_select 0, %s9, %s7
  $region1: #{tpu_custom_call.1} parent=0
    #allocation2 [shape = 'u8[8192]{0}', space=vmem, size = 0x2000, scoped, tag = 'output window, operand 0, single buffered']
    #allocation3 [shape = 's32[1]{0}', space=sflag, size = 0x4, scoped, tag = 'scoped memory for tpu_custom_call.1']
    %11 = vsyncpa [#allocation3], 0
    // Predicated region
    $region2: #{tpu_custom_call.1} parent=1 // pred_check
      _
    $region3: #{tpu_custom_call.1} parent=1 // pred_check_branch
      %13 = sbr.rel (0) target = $region5
    $region4: #{tpu_custom_call.1} parent=1 // pred_region
      _
    $region5: #{tpu_custom_call.1} parent=1 // pred_fallthru
      _
    // Predicated region
    $region6: #{tpu_custom_call.1} parent=1 // pred_check
      _
    $region7: #{tpu_custom_call.1} parent=1 // pred_check_branch
      %15 = sbr.rel (0) target = $region9
    $region8: #{tpu_custom_call.1} parent=1 // pred_region
      _
    $region9: #{tpu_custom_call.1} parent=1 // pred_fallthru
      _
    // Predicated region
    $region10: #{tpu_custom_call.1} parent=1 // pred_check
      _
    $region11: #{tpu_custom_call.1} parent=1 // pred_check_branch
      %17 = sbr.rel (0) target = $region13
    $region12: #{tpu_custom_call.1} parent=1 // pred_region
      _
    $region13: #{tpu_custom_call.1} parent=1 // pred_fallthru
      _
    // Predicated region
    $region14: #{tpu_custom_call.1} parent=1 // pred_check
      _
    $region15: #{tpu_custom_call.1} parent=1 // pred_check_branch
      %19 = sbr.rel (0) target = $region17
    $region16: #{tpu_custom_call.1} parent=1 // pred_region
      _
    $region17: #{tpu_custom_call.1} parent=1 // pred_fallthru
      _
    // Predicated region
    $region18: #{tpu_custom_call.1} parent=1 // pred_check
      _
    $region19: #{tpu_custom_call.1} parent=1 // pred_check_branch
      %21 = sbr.rel (0) target = $region21
    $region20: #{tpu_custom_call.1} parent=1 // pred_region
      _
    $region21: #{tpu_custom_call.1} parent=1 // pred_fallthru
      _
    // Predicated region
    $region22: #{tpu_custom_call.1} parent=1 // pred_check
      _
    $region23: #{tpu_custom_call.1} parent=1 // pred_check_branch
      %23 = sbr.rel (0) target = $region25
    $region24: #{tpu_custom_call.1} parent=1 // pred_region
      _
    $region25: #{tpu_custom_call.1} parent=1 // pred_fallthru
      _
    %v25 = vld [vmem:[%s5] sm:$0x1]
    %v26 = vld [vmem:[%s5 + $0x1] sm:$0x1]
    %v27 = vld [vmem:[%s5 + $0x2] sm:$0x1]
    %v28 = vld [vmem:[%s5 + $0x3] sm:$0x1]
    %v29 = vld [vmem:[%s0] sm:$0xf]
    %v30 = vld [vmem:[%s0 + $0x4] sm:$0xf]
    %v31 = vld [vmem:[%s3] sm:$0xf]
    %v32 = vld [vmem:[%s3 + $0x4] sm:$0xf]
    %v33 = vlaneseq
    %v34 = vshrl.u32 %v33, 7
    %v35 = vsub.s32 0, %v34
    %v36 = vrot.slane %v25, %v35
    %v39 = vunpack.c.l.b16 %v29
    %v40 = vunpack.c.l.b16 %v30
    %v41 = vpack.c.b16 %v40, %v39
    %v44 = vunpack.c.l.b16 %v31
    %v45 = vunpack.c.l.b16 %v32
    %v46 = vpack.c.b16 %v45, %v44
    %vm48 = vcmask 130048
    %v50 = vsel %vm48, %v41, 0
    %52 = vmatprep.subr.bf16.mxu0 0
    %53 = vmatpush1.bf16.msra.mxu0 %v46
    %54 = vmatprep.subr.bf16.mxu0 0
    %55 = vmatpush1.bf16.msra.mxu0 0
    %56 = vmatprep.subr.bf16.mxu0 0
    %57 = vmatpush1.bf16.msra.mxu0 0
    %58 = vmatprep.subr.bf16.mxu0 0
    %59 = vmatpush1.bf16.msra.mxu0 0
    %60 = vmatprep.subr.bf16.mxu0 0
    %61 = vmatpush1.bf16.msra.mxu0 0
    %62 = vmatprep.subr.bf16.mxu0 0
    %63 = vmatpush1.bf16.msra.mxu0 0
    %64 = vmatprep.subr.bf16.mxu0 0
    %65 = vmatpush1.bf16.msra.mxu0 0
    %66 = vmatprep.subr.bf16.mxu0 0
    %67 = vmatpush1.bf16.msra.mxu0 0
    %68 = vmatprep.subr.bf16.mxu0 0
    %69 = vmatpush1.bf16.msra.mxu0 0
    %70 = vmatprep.subr.bf16.mxu0 0
    %71 = vmatpush1.bf16.msra.mxu0 0
    %72 = vmatprep.subr.bf16.mxu0 0
    %73 = vmatpush1.bf16.msra.mxu0 0
    %74 = vmatprep.subr.bf16.mxu0 0
    %75 = vmatpush1.bf16.msra.mxu0 0
    %76 = vmatprep.subr.bf16.mxu0 0
    %77 = vmatpush1.bf16.msra.mxu0 0
    %78 = vmatprep.subr.bf16.mxu0 0
    %79 = vmatpush1.bf16.msra.mxu0 0
    %80 = vmatprep.subr.bf16.mxu0 0
    %81 = vmatpush1.bf16.msra.mxu0 0
    %82 = vmatprep.subr.bf16.mxu0 0
    %83 = vmatpush1.bf16.msra.mxu0 0
    %84 = vmatprep.mubr.bf16.mxu0 0
    %85 = vmatmul.mubr.bf16.gmra.mrb[0].mxu0 %v50
    %v86 = vpop.f32.mrb[0].mxu0
    %v87 = vadd.f32 %v36, %v86
    %v88 = vpop.f32.mrb[0].mxu0
    %v89 = vpop.f32.mrb[0].mxu0
    %v90 = vadd.f32 %v36, %v89
    %v91 = vpop.f32.mrb[0].mxu0
    %92 = vdwg.mxu0
    %v93 = vmul.f32 %v87, %v87
    %v94 = vmul.f32 %v90, %v90
    %95 = vadd.xlane.f32.xlu0 %v93
    %v96 = vpop.xlane.xlu0 %95
    %97 = vadd.xlane.f32.xlu0 %v94
    %v98 = vpop.xlane.xlu0 %97
    %v99 = vmul.f32 %v96, 0.03125
    %v100 = vmul.f32 %v98, 0.03125
    %v101 = vadd.f32 %v99, 1e-06
    %v102 = vadd.f32 %v100, 1e-06
    %v103 = vrsqrt.pop %v101
    %v104 = vrsqrt.pop %v102
    %v105 = vmul.f32 %v87, %v103
    %v106 = vmul.f32 %v90, %v104
    %v107 = vlaneseq
    %v108 = vshrl.u32 %v107, 7
    %v109 = vsub.s32 0, %v108
    %v110 = vrot.slane %v27, %v109
    %v111 = vmul.f32 %v105, %v110
    %v112 = vmul.f32 %v106, %v110
    %v113 = vld [vmem:[%s1] sm:$0xff]
    %v114 = vld [vmem:[%s1 + $0x8] sm:$0xff]
    %v115 = vld [vmem:[%s4] sm:$0xff]
    %v116 = vlaneseq
    %v117 = vshrl.u32 %v116, 7
    %v118 = vsub.s32 0, %v117
    %v119 = vrot.slane %v26, %v118
    %vm120 = vcmask 64512
    %v122 = vsel %vm120, %v113, 0
    %v125 = vsel %vm120, %v114, 0
    %127 = vmatprep.subr.mxu0 0.0
    %128 = vmatpush1.msra.mxu0 %v115
    %129 = vmatprep.subr.mxu0 0.0
    %130 = vmatpush1.msra.mxu0 0.0
    %131 = vmatprep.subr.mxu0 0.0
    %132 = vmatpush1.msra.mxu0 0.0
    %133 = vmatprep.subr.mxu0 0.0
    %134 = vmatpush1.msra.mxu0 0.0
    %135 = vmatprep.subr.mxu0 0.0
    %136 = vmatpush1.msra.mxu0 0.0
    %137 = vmatprep.subr.mxu0 0.0
    %138 = vmatpush1.msra.mxu0 0.0
    %139 = vmatprep.subr.mxu0 0.0
    %140 = vmatpush1.msra.mxu0 0.0
    %141 = vmatprep.subr.mxu0 0.0
    %142 = vmatpush1.msra.mxu0 0.0
    %143 = vmatprep.subr.mxu0 0.0
    %144 = vmatpush1.msra.mxu0 0.0
    %145 = vmatprep.subr.mxu0 0.0
    %146 = vmatpush1.msra.mxu0 0.0
    %147 = vmatprep.subr.mxu0 0.0
    %148 = vmatpush1.msra.mxu0 0.0
    %149 = vmatprep.subr.mxu0 0.0
    %150 = vmatpush1.msra.mxu0 0.0
    %151 = vmatprep.subr.mxu0 0.0
    %152 = vmatpush1.msra.mxu0 0.0
    %153 = vmatprep.subr.mxu0 0.0
    %154 = vmatpush1.msra.mxu0 0.0
    %155 = vmatprep.subr.mxu0 0.0
    %156 = vmatpush1.msra.mxu0 0.0
    %157 = vmatprep.subr.mxu0 0.0
    %158 = vmatpush1.msra.mxu0 0.0
    %159 = vmatprep.subr.mxu0 0.0
    %160 = vmatpush1.msra.mxu0 0.0
    %161 = vmatprep.subr.mxu0 0.0
    %162 = vmatpush1.msra.mxu0 0.0
    %163 = vmatprep.subr.mxu0 0.0
    %164 = vmatpush1.msra.mxu0 0.0
    %165 = vmatprep.subr.mxu0 0.0
    %166 = vmatpush1.msra.mxu0 0.0
    %167 = vmatprep.subr.mxu0 0.0
    %168 = vmatpush1.msra.mxu0 0.0
    %169 = vmatprep.subr.mxu0 0.0
    %170 = vmatpush1.msra.mxu0 0.0
    %171 = vmatprep.subr.mxu0 0.0
    %172 = vmatpush1.msra.mxu0 0.0
    %173 = vmatprep.subr.mxu0 0.0
    %174 = vmatpush1.msra.mxu0 0.0
    %175 = vmatprep.subr.mxu0 0.0
    %176 = vmatpush1.msra.mxu0 0.0
    %177 = vmatprep.subr.mxu0 0.0
    %178 = vmatpush1.msra.mxu0 0.0
    %179 = vmatprep.subr.mxu0 0.0
    %180 = vmatpush1.msra.mxu0 0.0
    %181 = vmatprep.subr.mxu0 0.0
    %182 = vmatpush1.msra.mxu0 0.0
    %183 = vmatprep.subr.mxu0 0.0
    %184 = vmatpush1.msra.mxu0 0.0
    %185 = vmatprep.subr.mxu0 0.0
    %186 = vmatpush1.msra.mxu0 0.0
    %187 = vmatprep.subr.mxu0 0.0
    %188 = vmatpush1.msra.mxu0 0.0
    %189 = vmatprep.subr.mxu0 0.0
    %190 = vmatpush1.msra.mxu0 0.0
    %191 = vmatprep.mubr.f32.mxu0 0.0
    %192 = vmatmul.mubr.f32.gmra.mrb[0].mxu0 %v122
    %v193 = vpop.f32.mrb[0].mxu0
    %v194 = vadd.f32 %v119, %v193
    %v195 = vpop.f32.mrb[0].mxu0
    %196 = vmatprep.mubr.f32.mxu0 0.0
    %197 = vmatmul.mubr.f32.gmra.mrb[0].mxu0 %v125
    %v198 = vpop.f32.mrb[0].mxu0
    %v199 = vadd.f32 %v119, %v198
    %v200 = vpop.f32.mrb[0].mxu0
    %201 = vdwg.mxu0
    %v202 = vmul.f32 %v194, %v194
    %v203 = vmul.f32 %v199, %v199
    %204 = vadd.xlane.f32.xlu0 %v202
    %v205 = vpop.xlane.xlu0 %204
    %206 = vadd.xlane.f32.xlu0 %v203
    %v207 = vpop.xlane.xlu0 %206
    %v208 = vmul.f32 %v205, 0.03125
    %v209 = vmul.f32 %v207, 0.03125
    %v210 = vadd.f32 %v208, 1e-06
    %v211 = vadd.f32 %v209, 1e-06
    %v212 = vrsqrt.pop %v210
    %v213 = vrsqrt.pop %v211
    %v214 = vmul.f32 %v194, %v212
    %v215 = vmul.f32 %v199, %v213
    %v216 = vlaneseq
    %v217 = vshrl.u32 %v216, 7
    %v218 = vsub.s32 0, %v217
    %v219 = vrot.slane %v28, %v218
    %v220 = vmul.f32 %v214, %v219
    %v221 = vmul.f32 %v215, %v219
    %v222 = vadd.f32 %v111, %v220
    %v223 = vadd.f32 %v112, %v221
    %v224 = vld [vmem:[%s2] sm:$0xf]
    %v225 = vld [vmem:[%s2 + $0x4] sm:$0xf]
    %v226 = vunpack.c.l.bf16 %v224
    %v227 = vunpack.c.l.bf16 %v225
    %v228 = vadd.f32 %v222, %v226
    %v229 = vadd.f32 %v223, %v227
    %230 = vst [vmem:[#allocation2] sm:$0xff] %v228
    %231 = vst [vmem:[#allocation2 + $0x8] sm:$0xff] %v229
    // Predicated region
    $region26: #{tpu_custom_call.1} parent=1 // pred_check
      _
    $region27: #{tpu_custom_call.1} parent=1 // pred_check_branch
      %233 = sbr.rel (0) target = $region29
    $region28: #{tpu_custom_call.1} parent=1 // pred_region
      %s235 = ssub.s32 256, 256
      %236 = vsyncadd [#allocation3], %s235
      %s237 = sshll.u32 [#allocation2], 4
      %s238 = int_to_ptr.vmem [resolvable:$true] %s237
      %243 = dma.vmem_to_hbm [thread:$0]  %s238, 256, %s6, [#allocation3], 128, 128, 8
    $region29: #{tpu_custom_call.1} parent=1 // pred_fallthru
      _
    // Predicated region
    $region30: #{tpu_custom_call.1} parent=1 // pred_check
      _
    $region31: #{tpu_custom_call.1} parent=1 // pred_check_branch
      %245 = sbr.rel (0) target = $region33
    $region32: #{tpu_custom_call.1} parent=1 // pred_region
      %246 = dma.done [#allocation3], 256
    $region33: #{tpu_custom_call.1} parent=1 // pred_fallthru
      _
    %247 = vsyncpa [#allocation3], 1

</llo_original>
